<compile_context>
chip_gen: v7x
topology: tpu7x:2x2x1
jax: 0.10.0
libtpu: 0.0.40
codegen_flags: <defaults>
</compile_context>

<pallas_src>
import functools

import numpy as np
import jax
import jax.numpy as jnp
from jax.experimental import pallas as pl
from jax.experimental.pallas import tpu as pltpu

_BN_EPS = 1e-5


# ----------------------------------------------------------------------------
# Linear-operator construction (host-side numpy, cached per (H, W, bins, R))
# ----------------------------------------------------------------------------
def adaptive_avg_pool_matrix(in_size, out_size):
    """P @ v performs nn.AdaptiveAvgPool1d(out_size) on a length-in_size vector."""
    P = np.zeros((out_size, in_size), np.float32)
    for i in range(out_size):
        s = (i * in_size) // out_size
        e = -(-((i + 1) * in_size) // out_size)  # ceil div
        P[i, s:e] = 1.0 / float(e - s)
    return P


def bilinear_upsample_matrix(in_size, out_size):
    """U @ v performs F.interpolate(mode='bilinear', align_corners=True) in 1-D."""
    U = np.zeros((out_size, in_size), np.float32)
    if in_size == 1:
        U[:, 0] = 1.0
        return U
    for o in range(out_size):
        src = o * (in_size - 1) / (out_size - 1) if out_size > 1 else 0.0
        i0 = min(int(np.floor(src)), in_size - 1)
        i1 = min(i0 + 1, in_size - 1)
        frac = src - i0
        U[o, i0] += 1.0 - frac
        U[o, i1] += frac
    return U


@functools.lru_cache(maxsize=None)
def _make_fused_operators(H, W, bins, R):
    """Concatenated pool / upsample operators + block mask for all bins.

    Returns (numpy):
      pool_t : (HW, B2T)      pooled_all = x(C,HW) @ pool_t
      up_t   : (B2T, HW)      up_all     = z_masked(bins*R, B2T) @ up_t
      mask   : (bins*R, B2T)  zeroes cross-bin columns of the stacked conv output
    where B2T = sum(b*b for b in bins).
    """
    pool_cols, up_rows, offsets = [], [], []
    off = 0
    for b in bins:
        Ph = adaptive_avg_pool_matrix(H, b)
        Pw = adaptive_avg_pool_matrix(W, b)
        Uh = bilinear_upsample_matrix(b, H)
        Uw = bilinear_upsample_matrix(b, W)
        P = np.kron(Ph, Pw)          # (b*b, HW)
        U = np.kron(Uh, Uw)          # (HW, b*b)
        pool_cols.append(P.T)        # (HW, b*b)
        up_rows.append(U.T)          # (b*b, HW)
        offsets.append(off)
        off += b * b
    pool_t = np.concatenate(pool_cols, axis=1)           # (HW, B2T)
    up_t = np.concatenate(up_rows, axis=0)                # (B2T, HW)
    mask = np.zeros((len(bins) * R, off), np.float32)     # (bins*R, B2T)
    for g, b in enumerate(bins):
        mask[g * R:(g + 1) * R, offsets[g]:offsets[g] + b * b] = 1.0
    return pool_t, up_t, mask


# ----------------------------------------------------------------------------
# Fused Pallas kernel: identity + all bins (pool -> conv1x1+BN -> ReLU -> upsample)
# ----------------------------------------------------------------------------
def _ppm_fused_kernel(C, x_ref, pt_ref, w_ref, shift_ref, mask_ref, ut_ref, o_ref):
    x = x_ref[0]                                                        # (C, HW) f32
    xc = x.astype(pt_ref.dtype)                                         # compute dtype
    # pooled features for every bin in one matmul: (C, B2T)
    pooled = jnp.dot(xc, pt_ref[...], preferred_element_type=jnp.float32)
    # stacked 1x1 conv (BN scale already folded into w): (bins*R, B2T)
    z = jnp.dot(w_ref[...], pooled.astype(w_ref.dtype),
                preferred_element_type=jnp.float32)
    # BN shift + ReLU, then zero out the cross-bin column blocks so the single
    # upsample matmul below only mixes each bin's own pooled columns.
    z = jnp.maximum(z + shift_ref[...], 0.0) * mask_ref[...]
    # upsample all bins in one matmul: (bins*R, HW)
    up = jnp.dot(z.astype(ut_ref.dtype), ut_ref[...],
                 preferred_element_type=jnp.float32)
    # write identity channels + pyramid channels into the lane-dense output slab
    o_ref[0, pl.ds(0, C), :] = x.astype(o_ref.dtype)
    o_ref[0, pl.ds(C, up.shape[0]), :] = up.astype(o_ref.dtype)


def ppm_forward(x, params, bins, compute_dtype=jnp.float32):
    """x: (N, C, H, W) float32. Returns (N, C + len(bins)*R, H, W)."""
    N, C, H, W = x.shape
    HW = H * W
    R = params[0]["w"].shape[0]
    G = len(bins)
    GR = G * R

    pool_np, up_np, mask_np = _make_fused_operators(H, W, tuple(bins), R)
    pool_t = jnp.asarray(pool_np, dtype=compute_dtype)          # (HW, B2T)
    up_t = jnp.asarray(up_np, dtype=compute_dtype)              # (B2T, HW)
    mask = jnp.asarray(mask_np, dtype=jnp.float32)              # (GR, B2T)
    B2T = pool_t.shape[1]

    # Fold eval-mode BN: scale into the conv weight, keep only the shift.
    w_rows, shift_rows = [], []
    for p in params:
        scale = p["gamma"] / jnp.sqrt(p["var"] + _BN_EPS)       # (R,)
        shift_rows.append(p["beta"] - p["mean"] * scale)        # (R,)
        w_rows.append(scale[:, None] * p["w"])                  # (R, C)
    w_all = jnp.concatenate(w_rows, axis=0).astype(compute_dtype)           # (GR, C)
    shift_all = jnp.concatenate(shift_rows, axis=0)[:, None].astype(jnp.float32)

    x_flat = x.reshape(N, C, HW)
    kernel = functools.partial(_ppm_fused_kernel, C)

    out_flat = pl.pallas_call(
        kernel,
        out_shape=jax.ShapeDtypeStruct((N, C + GR, HW), x.dtype),
        grid=(N,),
        in_specs=[
            pl.BlockSpec((1, C, HW), lambda n: (n, 0, 0)),      # x (only big tensor)
            pl.BlockSpec((HW, B2T), lambda n: (0, 0)),          # pool operator
            pl.BlockSpec((GR, C), lambda n: (0, 0)),            # stacked conv weights
            pl.BlockSpec((GR, 1), lambda n: (0, 0)),            # BN shift
            pl.BlockSpec((GR, B2T), lambda n: (0, 0)),          # bin mask
            pl.BlockSpec((B2T, HW), lambda n: (0, 0)),          # upsample operator
        ],
        out_specs=pl.BlockSpec((1, C + GR, HW), lambda n: (n, 0, 0)),
        compiler_params=pltpu.CompilerParams(
            dimension_semantics=("parallel",),                  # batch across TCs (v7x)
        ),
    )(x_flat, pool_t, w_all, shift_all, mask, up_t)

    return out_flat.reshape(N, C + GR, H, W)


# ----------------------------------------------------------------------------
# Pure-JAX reference (no Pallas), per-bin math identical to the PyTorch module
# ----------------------------------------------------------------------------
def ppm_reference(x, params, bins):
    N, C, H, W = x.shape
    HW = H * W
    xf = x.reshape(N, C, HW)
    outs = [x]
    for b, p in zip(bins, params):
        Ph = adaptive_avg_pool_matrix(H, b)
        Pw = adaptive_avg_pool_matrix(W, b)
        Uh = bilinear_upsample_matrix(b, H)
        Uw = bilinear_upsample_matrix(b, W)
        P = jnp.asarray(np.kron(Ph, Pw))    # (b*b, HW)
        U = jnp.asarray(np.kron(Uh, Uw))    # (HW, b*b)
        scale = p["gamma"] / jnp.sqrt(p["var"] + _BN_EPS)
        shift = p["beta"] - p["mean"] * scale
        pooled = jnp.einsum("nck,bk->ncb", xf, P)
        z = jnp.einsum("rc,ncb->nrb", p["w"], pooled)
        z = jnp.maximum(z * scale[None, :, None] + shift[None, :, None], 0.0)
        up = jnp.einsum("nrb,kb->nrk", z, U)
        outs.append(up.reshape(N, -1, H, W))
    return jnp.concatenate(outs, axis=1)


# ----------------------------------------------------------------------------
if __name__ == "__main__":
    key = jax.random.PRNGKey(0)
    N, C, H, W = 2, 8, 16, 16
    bins = (1, 2, 4, 8)
    R = 2  # reduction_dim

    keys = jax.random.split(key, 1 + 5 * len(bins))
    x = jax.random.normal(keys[0], (N, C, H, W), jnp.float32)

    params = []
    k = 1
    for _ in bins:
        w = jax.random.normal(keys[k], (R, C), jnp.float32) * 0.2
        gamma = jax.random.uniform(keys[k + 1], (R,), jnp.float32, minval=0.5, maxval=1.5)
        beta = jax.random.normal(keys[k + 2], (R,), jnp.float32) * 0.1
        mean = jax.random.normal(keys[k + 3], (R,), jnp.float32) * 0.1
        var = jax.random.uniform(keys[k + 4], (R,), jnp.float32, minval=0.5, maxval=1.5)
        params.append(dict(w=w, gamma=gamma, beta=beta, mean=mean, var=var))
        k += 5

    # f32 path: must match the reference tightly.
    out = jax.block_until_ready(ppm_forward(x, params, bins))
    ref = jax.block_until_ready(ppm_reference(x, params, bins))
    assert out.shape == (N, C + len(bins) * R, H, W), out.shape
    np.testing.assert_allclose(np.asarray(out), np.asarray(ref), rtol=1e-5, atol=1e-5)

    # bf16 matmul path (MXU-native rate, halved operator/VMEM traffic);
    # BN/ReLU and accumulation stay f32, so only loose agreement is expected.
    out_bf16 = jax.block_until_ready(
        ppm_forward(x, params, bins, compute_dtype=jnp.bfloat16))
    np.testing.assert_allclose(np.asarray(out_bf16), np.asarray(ref),
                               rtol=1e-1, atol=2e-1)

    print("KERNEL_OK")
</pallas_src>

<mosaic_0001>
module attributes {stable_mosaic.version = 11 : i64} {
  func.func @_ppm_fused_kernel(%arg0: i32, %arg1: memref<1x8x256xf32, #tpu.memory_space<vmem>>, %arg2: memref<256x85xf32, #tpu.memory_space<vmem>>, %arg3: memref<8x8xf32, #tpu.memory_space<vmem>>, %arg4: memref<8x1xf32, #tpu.memory_space<vmem>>, %arg5: memref<8x85xf32, #tpu.memory_space<vmem>>, %arg6: memref<85x256xf32, #tpu.memory_space<vmem>>, %arg7: memref<1x16x256xf32, #tpu.memory_space<vmem>>) attributes {dimension_semantics = [#tpu.dimension_semantics<parallel>], iteration_bounds = array<i64: 2>, scalar_prefetch = 0 : i64, scratch_operands = 0 : i64, tpu.core_type = #tpu.core_type<tc>, window_params = [{transform_indices = @transform_0, window_bounds = array<i64: 1, 8, 256>}, {pipeline_mode = #tpu.pipeline_mode<synchronous>, transform_indices = @transform_1, window_bounds = array<i64: 256, 85>}, {pipeline_mode = #tpu.pipeline_mode<synchronous>, transform_indices = @transform_2, window_bounds = array<i64: 8, 8>}, {pipeline_mode = #tpu.pipeline_mode<synchronous>, transform_indices = @transform_3, window_bounds = array<i64: 8, 1>}, {pipeline_mode = #tpu.pipeline_mode<synchronous>, transform_indices = @transform_4, window_bounds = array<i64: 8, 85>}, {pipeline_mode = #tpu.pipeline_mode<synchronous>, transform_indices = @transform_5, window_bounds = array<i64: 85, 256>}, {transform_indices = @transform_6, window_bounds = array<i64: 1, 16, 256>}]} {
    %c0 = arith.constant 0 : index
    %c0_0 = arith.constant 0 : index
    %c0_1 = arith.constant 0 : index
    %0 = vector.load %arg1[%c0, %c0_0, %c0_1] : memref<1x8x256xf32, #tpu.memory_space<vmem>>, vector<1x8x256xf32>
    %1 = vector.shape_cast %0 : vector<1x8x256xf32> to vector<8x256xf32>
    %c0_2 = arith.constant 0 : index
    %c0_3 = arith.constant 0 : index
    %2 = vector.load %arg2[%c0_2, %c0_3] : memref<256x85xf32, #tpu.memory_space<vmem>>, vector<256x85xf32>
    %cst = arith.constant dense<0.000000e+00> : vector<8x85xf32>
    %3 = tpu.matmul %1, %2, %cst {dimension_numbers = #tpu.dot_dimension_numbers<[1], [0], [0], [1], [0, 0, 1, 1], [], []>} : vector<8x256xf32>, vector<256x85xf32>, vector<8x85xf32> -> vector<8x85xf32>
    %c0_4 = arith.constant 0 : index
    %c0_5 = arith.constant 0 : index
    %4 = vector.load %arg3[%c0_4, %c0_5] : memref<8x8xf32, #tpu.memory_space<vmem>>, vector<8x8xf32>
    %cst_6 = arith.constant dense<0.000000e+00> : vector<8x85xf32>
    %5 = tpu.matmul %4, %3, %cst_6 {dimension_numbers = #tpu.dot_dimension_numbers<[1], [0], [0], [1], [0, 0, 1, 1], [], []>} : vector<8x8xf32>, vector<8x85xf32>, vector<8x85xf32> -> vector<8x85xf32>
    %c0_7 = arith.constant 0 : index
    %c0_8 = arith.constant 0 : index
    %6 = vector.load %arg4[%c0_7, %c0_8] : memref<8x1xf32, #tpu.memory_space<vmem>>, vector<8x1xf32>
    %7 = vector.broadcast %6 : vector<8x1xf32> to vector<8x85xf32>
    %8 = arith.addf %5, %7 : vector<8x85xf32>
    %cst_9 = arith.constant 0.000000e+00 : f32
    %9 = vector.broadcast %cst_9 : f32 to vector<8x85xf32>
    %10 = arith.maximumf %8, %9 : vector<8x85xf32>
    %c0_10 = arith.constant 0 : index
    %c0_11 = arith.constant 0 : index
    %11 = vector.load %arg5[%c0_10, %c0_11] : memref<8x85xf32, #tpu.memory_space<vmem>>, vector<8x85xf32>
    %12 = arith.mulf %10, %11 : vector<8x85xf32>
    %c0_12 = arith.constant 0 : index
    %c0_13 = arith.constant 0 : index
    %13 = vector.load %arg6[%c0_12, %c0_13] : memref<85x256xf32, #tpu.memory_space<vmem>>, vector<85x256xf32>
    %cst_14 = arith.constant dense<0.000000e+00> : vector<8x256xf32>
    %14 = tpu.matmul %12, %13, %cst_14 {dimension_numbers = #tpu.dot_dimension_numbers<[1], [0], [0], [1], [0, 0, 1, 1], [], []>} : vector<8x85xf32>, vector<85x256xf32>, vector<8x256xf32> -> vector<8x256xf32>
    %c0_15 = arith.constant 0 : index
    %c0_16 = arith.constant 0 : index
    %c0_17 = arith.constant 0 : index
    %15 = vector.load %arg7[%c0_15, %c0_16, %c0_17] : memref<1x16x256xf32, #tpu.memory_space<vmem>>, vector<1x8x256xf32>
    %16 = vector.shape_cast %15 : vector<1x8x256xf32> to vector<8x256xf32>
    %17 = vector.shape_cast %1 : vector<8x256xf32> to vector<1x8x256xf32>
    tpu.vector_store %arg7[%c0_15, %c0_16, %c0_17], %17 {strides = array<i32>} : memref<1x16x256xf32, #tpu.memory_space<vmem>>, vector<1x8x256xf32>,
    %c0_18 = arith.constant 0 : index
    %c8 = arith.constant 8 : index
    %c0_19 = arith.constant 0 : index
    %18 = vector.load %arg7[%c0_18, %c8, %c0_19] : memref<1x16x256xf32, #tpu.memory_space<vmem>>, vector<1x8x256xf32>
    %19 = vector.shape_cast %18 : vector<1x8x256xf32> to vector<8x256xf32>
    %20 = vector.shape_cast %14 : vector<8x256xf32> to vector<1x8x256xf32>
    tpu.vector_store %arg7[%c0_18, %c8, %c0_19], %20 {strides = array<i32>} : memref<1x16x256xf32, #tpu.memory_space<vmem>>, vector<1x8x256xf32>,
    return
  }
  func.func @transform_0(%arg0: i32) -> (i32, i32, i32) {
    %c0_i32 = arith.constant 0 : i32
    %c0_i32_0 = arith.constant 0 : i32
    %c0_i32_1 = arith.constant 0 : i32
    return %arg0, %c0_i32, %c0_i32_0 : i32, i32, i32
  }
  func.func @transform_1(%arg0: i32) -> (i32, i32) {
    %c0_i32 = arith.constant 0 : i32
    %c0_i32_0 = arith.constant 0 : i32
    %c0_i32_1 = arith.constant 0 : i32
    return %c0_i32, %c0_i32_0 : i32, i32
  }
  func.func @transform_2(%arg0: i32) -> (i32, i32) {
    %c0_i32 = arith.constant 0 : i32
    %c0_i32_0 = arith.constant 0 : i32
    %c0_i32_1 = arith.constant 0 : i32
    return %c0_i32, %c0_i32_0 : i32, i32
  }
  func.func @transform_3(%arg0: i32) -> (i32, i32) {
    %c0_i32 = arith.constant 0 : i32
    %c0_i32_0 = arith.constant 0 : i32
    %c0_i32_1 = arith.constant 0 : i32
    return %c0_i32, %c0_i32_0 : i32, i32
  }
  func.func @transform_4(%arg0: i32) -> (i32, i32) {
    %c0_i32 = arith.constant 0 : i32
    %c0_i32_0 = arith.constant 0 : i32
    %c0_i32_1 = arith.constant 0 : i32
    return %c0_i32, %c0_i32_0 : i32, i32
  }
  func.func @transform_5(%arg0: i32) -> (i32, i32) {
    %c0_i32 = arith.constant 0 : i32
    %c0_i32_0 = arith.constant 0 : i32
    %c0_i32_1 = arith.constant 0 : i32
    return %c0_i32, %c0_i32_0 : i32, i32
  }
  func.func @transform_6(%arg0: i32) -> (i32, i32, i32) {
    %c0_i32 = arith.constant 0 : i32
    %c0_i32_0 = arith.constant 0 : i32
    %c0_i32_1 = arith.constant 0 : i32
    return %arg0, %c0_i32, %c0_i32_0 : i32, i32, i32
  }
}

</mosaic_0001>

<llo_original>
// kernel: tpu_custom_call.1
$region0: #{tpu_custom_call.1}
  #allocation0 [shape = 'u32[]', space=smem, size = 0x4, offset = 0x4, fixed_abs, tag = 'smem constant byte address 0x4 - core index']
  #allocation1 [shape = 'u32[144,128]{1,0:T(1,128)}', space=vmem, size = 0x12000, scoped, tag = 'internal scratch']
  %s0 = inlined_call_operand.vmem [shape: f32[2,8,256], index: 0, kind: input, shape index: {}]
  %s1 = inlined_call_operand.vmem [shape: f32[256,85], index: 1, kind: input, shape index: {}]
  %s2 = inlined_call_operand.vmem [shape: f32[8,8], index: 2, kind: input, shape index: {}]
  %s3 = inlined_call_operand.vmem [shape: f32[8,1], index: 3, kind: input, shape index: {}]
  %s4 = inlined_call_operand.vmem [shape: f32[8,85], index: 4, kind: input, shape index: {}]
  %s5 = inlined_call_operand.vmem [shape: f32[85,256], index: 5, kind: input, shape index: {}]
  %s6 = inlined_call_operand.hbm [shape: f32[2,16,256], index: 6, kind: output, shape index: {}]
  %s7 = sld [smem:[#allocation0]]
  $region57: #{tpu_custom_call.1} parent=0
    _
  %s9 = ssub.s32 1, %s7
  %s10 = scalar_select 0, %s9, %s7
  $region1: #{tpu_custom_call.1} parent=0
    #allocation2 [shape = 'u8[32768]{0}', space=vmem, size = 0x8000, scoped, tag = 'output window, operand 0']
    #allocation3 [shape = 's32[2]{0}', space=sflag, size = 0x8, scoped, tag = 'scoped memory for tpu_custom_call.1']
    %11 = vsyncpa [#allocation3], 0
    %s12 = scalar_lea.sflag [#allocation3], 1
    %13 = vsyncpa %s12, 0
    loop: start=0, step=1, limit=4
    $region2: #{tpu_custom_call.1} parent=1 // loop_pre_header
      _
    $region3: #{tpu_custom_call.1} parent=1 // loop_header
      %s15 = sphi 0, %s19
      %p16 = scmp.ge.s32.totalorder %s15, 4
      %s25 = sphi 0, %s27
      %s28 = sphi 0, %s25
      %s29 = sphi 0, %s28
      %s45 = sphi 0, %s29
      %s49 = sphi 0, %s49
      %s51 = sphi 0, %s49
      %s52 = sphi 0, %s51
      %s66 = sphi 0, %s52
      %s70 = sphi 0, %s70
      %s72 = sphi 0, %s70
      %s73 = sphi 0, %s72
      %s87 = sphi 0, %s73
      %s91 = sphi 0, %s91
      %s93 = sphi 0, %s91
      %s94 = sphi 0, %s93
      %s108 = sphi 0, %s94
      %s112 = sphi 0, %s112
      %s114 = sphi 0, %s112
      %s115 = sphi 0, %s114
      %s129 = sphi 0, %s115
      %s133 = sphi 0, %s133
      %s135 = sphi 0, %s133
      %s136 = sphi 0, %s135
      %s150 = sphi 0, %s136
      %s156 = sphi 0, %s158
      %s159 = sphi 0, %s156
      %s160 = sphi 0, %s159
      %s176 = sphi 0, %s160
    $region4: #{tpu_custom_call.1} parent=1 // loop_header_branch
      %18 = sbr.rel (%p16) target = $region8
    $region5: #{tpu_custom_call.1} parent=1 // loop_body
      %s20 = ssub.s32 %s15, 1
      %s21 = ssub.s32 %s15, 2
      %s22 = sadd.s32 %s15, 1
      %s23 = ssub.s32 %s15, %s22
      %p24 = scmp.eq.s32.totalorder %s23, 0
      %s26 = sadd.s32 %s25, 1
      %s27 = scalar_select %p24, %s25, %s26
      %p30 = pneg %p24
      %p31 = scmp.eq.s32.totalorder %s15, 1
      %p32 = por %p30, %p31
      %p33 = scmp.ne.s32.totalorder %s25, %s28
      %p34 = scmp.eq.s32.totalorder %s15, 0
      %p35 = por %p33, %p34
      %p36 = scmp.ne.s32.totalorder %s25, %s28
      %p37 = scmp.eq.s32.totalorder %s20, 1
      %p38 = por %p36, %p37
      %p39 = scmp.ne.s32.totalorder %s28, %s29
      %p40 = scmp.eq.s32.totalorder %s20, 0
      %p41 = por %p39, %p40
      %p42 = scmp.ne.s32.totalorder %s28, %s29
      %p43 = scmp.eq.s32.totalorder %s21, 1
      %p44 = por %p42, %p43
      %p46 = scmp.ne.s32.totalorder %s29, %s45
      %p47 = scmp.eq.s32.totalorder %s21, 0
      %p48 = por %p46, %p47
      %s50 = sadd.s32 %s49, 1
      %p53 = scmp.eq.s32.totalorder %s15, 1
      %p54 = scmp.ne.s32.totalorder %s49, %s51
      %p55 = scmp.eq.s32.totalorder %s15, 0
      %p56 = por %p54, %p55
      %p57 = scmp.ne.s32.totalorder %s49, %s51
      %p58 = scmp.eq.s32.totalorder %s20, 1
      %p59 = por %p57, %p58
      %p60 = scmp.ne.s32.totalorder %s51, %s52
      %p61 = scmp.eq.s32.totalorder %s20, 0
      %p62 = por %p60, %p61
      %p63 = scmp.ne.s32.totalorder %s51, %s52
      %p64 = scmp.eq.s32.totalorder %s21, 1
      %p65 = por %p63, %p64
      %p67 = scmp.ne.s32.totalorder %s52, %s66
      %p68 = scmp.eq.s32.totalorder %s21, 0
      %p69 = por %p67, %p68
      %s71 = sadd.s32 %s70, 1
      %p74 = scmp.eq.s32.totalorder %s15, 1
      %p75 = scmp.ne.s32.totalorder %s70, %s72
      %p76 = scmp.eq.s32.totalorder %s15, 0
      %p77 = por %p75, %p76
      %p78 = scmp.ne.s32.totalorder %s70, %s72
      %p79 = scmp.eq.s32.totalorder %s20, 1
      %p80 = por %p78, %p79
      %p81 = scmp.ne.s32.totalorder %s72, %s73
      %p82 = scmp.eq.s32.totalorder %s20, 0
      %p83 = por %p81, %p82
      %p84 = scmp.ne.s32.totalorder %s72, %s73
      %p85 = scmp.eq.s32.totalorder %s21, 1
      %p86 = por %p84, %p85
      %p88 = scmp.ne.s32.totalorder %s73, %s87
      %p89 = scmp.eq.s32.totalorder %s21, 0
      %p90 = por %p88, %p89
      %s92 = sadd.s32 %s91, 1
      %p95 = scmp.eq.s32.totalorder %s15, 1
      %p96 = scmp.ne.s32.totalorder %s91, %s93
      %p97 = scmp.eq.s32.totalorder %s15, 0
      %p98 = por %p96, %p97
      %p99 = scmp.ne.s32.totalorder %s91, %s93
      %p100 = scmp.eq.s32.totalorder %s20, 1
      %p101 = por %p99, %p100
      %p102 = scmp.ne.s32.totalorder %s93, %s94
      %p103 = scmp.eq.s32.totalorder %s20, 0
      %p104 = por %p102, %p103
      %p105 = scmp.ne.s32.totalorder %s93, %s94
      %p106 = scmp.eq.s32.totalorder %s21, 1
      %p107 = por %p105, %p106
      %p109 = scmp.ne.s32.totalorder %s94, %s108
      %p110 = scmp.eq.s32.totalorder %s21, 0
      %p111 = por %p109, %p110
      %s113 = sadd.s32 %s112, 1
      %p116 = scmp.eq.s32.totalorder %s15, 1
      %p117 = scmp.ne.s32.totalorder %s112, %s114
      %p118 = scmp.eq.s32.totalorder %s15, 0
      %p119 = por %p117, %p118
      %p120 = scmp.ne.s32.totalorder %s112, %s114
      %p121 = scmp.eq.s32.totalorder %s20, 1
      %p122 = por %p120, %p121
      %p123 = scmp.ne.s32.totalorder %s114, %s115
      %p124 = scmp.eq.s32.totalorder %s20, 0
      %p125 = por %p123, %p124
      %p126 = scmp.ne.s32.totalorder %s114, %s115
      %p127 = scmp.eq.s32.totalorder %s21, 1
      %p128 = por %p126, %p127
      %p130 = scmp.ne.s32.totalorder %s115, %s129
      %p131 = scmp.eq.s32.totalorder %s21, 0
      %p132 = por %p130, %p131
      %s134 = sadd.s32 %s133, 1
      %p137 = scmp.eq.s32.totalorder %s15, 1
      %p138 = scmp.ne.s32.totalorder %s133, %s135
      %p139 = scmp.eq.s32.totalorder %s15, 0
      %p140 = por %p138, %p139
      %p141 = scmp.ne.s32.totalorder %s133, %s135
      %p142 = scmp.eq.s32.totalorder %s20, 1
      %p143 = por %p141, %p142
      %p144 = scmp.ne.s32.totalorder %s135, %s136
      %p145 = scmp.eq.s32.totalorder %s20, 0
      %p146 = por %p144, %p145
      %p147 = scmp.ne.s32.totalorder %s135, %s136
      %p148 = scmp.eq.s32.totalorder %s21, 1
      %p149 = por %p147, %p148
      %p151 = scmp.ne.s32.totalorder %s136, %s150
      %p152 = scmp.eq.s32.totalorder %s21, 0
      %p153 = por %p151, %p152
      %s154 = ssub.s32 %s15, %s22
      %p155 = scmp.eq.s32.totalorder %s154, 0
      %s157 = sadd.s32 %s156, 1
      %s158 = scalar_select %p155, %s156, %s157
      %p161 = pneg %p155
      %p162 = scmp.eq.s32.totalorder %s15, 1
      %p163 = por %p161, %p162
      %p164 = scmp.ne.s32.totalorder %s156, %s159
      %p165 = scmp.eq.s32.totalorder %s15, 0
      %p166 = por %p164, %p165
      %p167 = scmp.ne.s32.totalorder %s156, %s159
      %p168 = scmp.eq.s32.totalorder %s20, 1
      %p169 = por %p167, %p168
      %p170 = scmp.ne.s32.totalorder %s159, %s160
      %p171 = scmp.eq.s32.totalorder %s20, 0
      %p172 = por %p170, %p171
      %p173 = scmp.ne.s32.totalorder %s159, %s160
      %p174 = scmp.eq.s32.totalorder %s21, 1
      %p175 = por %p173, %p174
      %p177 = scmp.ne.s32.totalorder %s160, %s176
      %p178 = scmp.eq.s32.totalorder %s21, 0
      %p179 = por %p177, %p178
      %p180 = scmp.le.s32.totalorder 1, %s15
      %p181 = scmp.lt.s32.totalorder %s15, 3
      %p182 = pnand %p180, %p181
      %p183 = pneg %p182
      // Predicated region
      $region9: #{tpu_custom_call.1} parent=5 // pred_check
        _
      $region10: #{tpu_custom_call.1} parent=5 // pred_check_branch
        %185 = sbr.rel (%p182) target = $region12
      $region11: #{tpu_custom_call.1} parent=5 // pred_region
        %s186 = ssub.s32 %s15, 1
        // Predicated region
        $region13: #{tpu_custom_call.1} parent=11 // pred_check
          %p187 = pneg %p62
        $region14: #{tpu_custom_call.1} parent=11 // pred_check_branch
          %189 = sbr.rel (%p187) target = $region16
        $region15: #{tpu_custom_call.1} parent=11 // pred_region
          _
        $region16: #{tpu_custom_call.1} parent=11 // pred_fallthru
          _
        // Predicated region
        $region17: #{tpu_custom_call.1} parent=11 // pred_check
          %p190 = pneg %p83
        $region18: #{tpu_custom_call.1} parent=11 // pred_check_branch
          %192 = sbr.rel (%p190) target = $region20
        $region19: #{tpu_custom_call.1} parent=11 // pred_region
          _
        $region20: #{tpu_custom_call.1} parent=11 // pred_fallthru
          _
        // Predicated region
        $region21: #{tpu_custom_call.1} parent=11 // pred_check
          %p193 = pneg %p104
        $region22: #{tpu_custom_call.1} parent=11 // pred_check_branch
          %195 = sbr.rel (%p193) target = $region24
        $region23: #{tpu_custom_call.1} parent=11 // pred_region
          _
        $region24: #{tpu_custom_call.1} parent=11 // pred_fallthru
          _
        // Predicated region
        $region25: #{tpu_custom_call.1} parent=11 // pred_check
          %p196 = pneg %p125
        $region26: #{tpu_custom_call.1} parent=11 // pred_check_branch
          %198 = sbr.rel (%p196) target = $region28
        $region27: #{tpu_custom_call.1} parent=11 // pred_region
          _
        $region28: #{tpu_custom_call.1} parent=11 // pred_fallthru
          _
        // Predicated region
        $region29: #{tpu_custom_call.1} parent=11 // pred_check
          %p199 = pneg %p146
        $region30: #{tpu_custom_call.1} parent=11 // pred_check_branch
          %201 = sbr.rel (%p199) target = $region32
        $region31: #{tpu_custom_call.1} parent=11 // pred_region
          _
        $region32: #{tpu_custom_call.1} parent=11 // pred_fallthru
          _
      $region12: #{tpu_custom_call.1} parent=5 // pred_fallthru
        _
      %p202 = scmp.lt.s32.totalorder %s15, 2
      // Predicated region
      $region33: #{tpu_custom_call.1} parent=5 // pred_check
        %p203 = pneg %p202
      $region34: #{tpu_custom_call.1} parent=5 // pred_check_branch
        %205 = sbr.rel (%p203) target = $region36
      $region35: #{tpu_custom_call.1} parent=5 // pred_region
        // Predicated region
        $region37: #{tpu_custom_call.1} parent=35 // pred_check
          %p206 = pneg %p35
        $region38: #{tpu_custom_call.1} parent=35 // pred_check_branch
          %208 = sbr.rel (%p206) target = $region40
        $region39: #{tpu_custom_call.1} parent=35 // pred_region
          %p209 = scmp.lt.s32.totalorder %s15, 1
          %s210 = scalar_select %p209, %s15, 1
          %s211 = smul.addr %s210, 2
          %s212 = smul.addr %s211, 8
          %s213 = scalar_lea.vmem %s0, %s212
        $region40: #{tpu_custom_call.1} parent=35 // pred_fallthru
          _
      $region36: #{tpu_custom_call.1} parent=5 // pred_fallthru
        _
      %p214 = scmp.le.s32.totalorder 1, %s15
      %p215 = scmp.lt.s32.totalorder %s15, 3
      %p216 = pnand %p214, %p215
      %p217 = pneg %p216
      // Predicated region
      $region41: #{tpu_custom_call.1} parent=5 // pred_check
        _
      $region42: #{tpu_custom_call.1} parent=5 // pred_check_branch
        %219 = sbr.rel (%p216) target = $region44
      $region43: #{tpu_custom_call.1} parent=5 // pred_region
        %s220 = ssub.s32 %s15, 1
        %p221 = scmp.lt.s32.totalorder %s20, 1
        %s222 = scalar_select %p221, %s20, 1
        %s223 = smul.addr %s222, 2
        %s224 = smul.addr %s223, 8
        %s225 = scalar_lea.vmem %s0, %s224
        %p226 = pneg %p41
        %p227 = pneg %p38
        %p228 = pneg %p62
        %p229 = pneg %p59
        %p230 = pneg %p83
        %p231 = pneg %p80
        %p232 = pneg %p104
        %p233 = pneg %p101
        %p234 = pneg %p125
        %p235 = pneg %p122
        %p236 = pneg %p146
        %p237 = pneg %p143
        %p238 = pneg %p172
        %p239 = pneg %p169
        %s240 = sand.u32 %s159, 1
        %s241 = scalar_lea.sflag [#allocation3], %s240
        %s242 = sand.u32 %s159, 1
        %s243 = smul.addr %s242, 32
        %s244 = scalar_lea.vmem [#allocation2], %s243
        %p245 = scmp.lt.s32.totalorder %s20, 1
        %s246 = scalar_select %p245, %s20, 1
        %s247 = smul.addr %s246, 2
        %s248 = smul.addr %s247, 8
        %s249 = scalar_lea.vmem %s0, %s248
        %v250 = vld [vmem:[%s249] sm:$0xff]
        %v251 = vld [vmem:[%s249 + $0x8] sm:$0xff]
        %v252 = vld [vmem:[%s1] sm:$0xff]
        %v253 = vld [vmem:[%s1 + $0x8] sm:$0xff]
        %v254 = vld [vmem:[%s1 + $0x10] sm:$0xff]
        %v255 = vld [vmem:[%s1 + $0x18] sm:$0xff]
        %v256 = vld [vmem:[%s1 + $0x20] sm:$0xff]
        %v257 = vld [vmem:[%s1 + $0x28] sm:$0xff]
        %v258 = vld [vmem:[%s1 + $0x30] sm:$0xff]
        %v259 = vld [vmem:[%s1 + $0x38] sm:$0xff]
        %v260 = vld [vmem:[%s1 + $0x40] sm:$0xff]
        %v261 = vld [vmem:[%s1 + $0x48] sm:$0xff]
        %v262 = vld [vmem:[%s1 + $0x50] sm:$0xff]
        %v263 = vld [vmem:[%s1 + $0x58] sm:$0xff]
        %v264 = vld [vmem:[%s1 + $0x60] sm:$0xff]
        %v265 = vld [vmem:[%s1 + $0x68] sm:$0xff]
        %v266 = vld [vmem:[%s1 + $0x70] sm:$0xff]
        %v267 = vld [vmem:[%s1 + $0x78] sm:$0xff]
        %v268 = vld [vmem:[%s1 + $0x80] sm:$0xff]
        %v269 = vld [vmem:[%s1 + $0x88] sm:$0xff]
        %v270 = vld [vmem:[%s1 + $0x90] sm:$0xff]
        %v271 = vld [vmem:[%s1 + $0x98] sm:$0xff]
        %v272 = vld [vmem:[%s1 + $0xa0] sm:$0xff]
        %v273 = vld [vmem:[%s1 + $0xa8] sm:$0xff]
        %v274 = vld [vmem:[%s1 + $0xb0] sm:$0xff]
        %v275 = vld [vmem:[%s1 + $0xb8] sm:$0xff]
        %v276 = vld [vmem:[%s1 + $0xc0] sm:$0xff]
        %v277 = vld [vmem:[%s1 + $0xc8] sm:$0xff]
        %v278 = vld [vmem:[%s1 + $0xd0] sm:$0xff]
        %v279 = vld [vmem:[%s1 + $0xd8] sm:$0xff]
        %v280 = vld [vmem:[%s1 + $0xe0] sm:$0xff]
        %v281 = vld [vmem:[%s1 + $0xe8] sm:$0xff]
        %v282 = vld [vmem:[%s1 + $0xf0] sm:$0xff]
        %v283 = vld [vmem:[%s1 + $0xf8] sm:$0xff]
        %284 = vmatprep.subr.mxu0 0.0
        %285 = vmatpush1.msra.mxu0 %v252
        %286 = vmatprep.subr.mxu0 0.0
        %287 = vmatpush1.msra.mxu0 %v253
        %288 = vmatprep.subr.mxu0 0.0
        %289 = vmatpush1.msra.mxu0 %v254
        %290 = vmatprep.subr.mxu0 0.0
        %291 = vmatpush1.msra.mxu0 %v255
        %292 = vmatprep.subr.mxu0 0.0
        %293 = vmatpush1.msra.mxu0 %v256
        %294 = vmatprep.subr.mxu0 0.0
        %295 = vmatpush1.msra.mxu0 %v257
        %296 = vmatprep.subr.mxu0 0.0
        %297 = vmatpush1.msra.mxu0 %v258
        %298 = vmatprep.subr.mxu0 0.0
        %299 = vmatpush1.msra.mxu0 %v259
        %300 = vmatprep.subr.mxu0 0.0
        %301 = vmatpush1.msra.mxu0 %v260
        %302 = vmatprep.subr.mxu0 0.0
        %303 = vmatpush1.msra.mxu0 %v261
        %304 = vmatprep.subr.mxu0 0.0
        %305 = vmatpush1.msra.mxu0 %v262
        %306 = vmatprep.subr.mxu0 0.0
        %307 = vmatpush1.msra.mxu0 %v263
        %308 = vmatprep.subr.mxu0 0.0
        %309 = vmatpush1.msra.mxu0 %v264
        %310 = vmatprep.subr.mxu0 0.0
        %311 = vmatpush1.msra.mxu0 %v265
        %312 = vmatprep.subr.mxu0 0.0
        %313 = vmatpush1.msra.mxu0 %v266
        %314 = vmatprep.subr.mxu0 0.0
        %315 = vmatpush1.msra.mxu0 %v267
        %316 = vmatprep.subr.mxu0 0.0
        %317 = vmatpush1.msra.mxu0 %v268
        %318 = vmatprep.subr.mxu0 0.0
        %319 = vmatpush1.msra.mxu0 %v269
        %320 = vmatprep.subr.mxu0 0.0
        %321 = vmatpush1.msra.mxu0 %v270
        %322 = vmatprep.subr.mxu0 0.0
        %323 = vmatpush1.msra.mxu0 %v271
        %324 = vmatprep.subr.mxu0 0.0
        %325 = vmatpush1.msra.mxu0 %v272
        %326 = vmatprep.subr.mxu0 0.0
        %327 = vmatpush1.msra.mxu0 %v273
        %328 = vmatprep.subr.mxu0 0.0
        %329 = vmatpush1.msra.mxu0 %v274
        %330 = vmatprep.subr.mxu0 0.0
        %331 = vmatpush1.msra.mxu0 %v275
        %332 = vmatprep.subr.mxu0 0.0
        %333 = vmatpush1.msra.mxu0 %v276
        %334 = vmatprep.subr.mxu0 0.0
        %335 = vmatpush1.msra.mxu0 %v277
        %336 = vmatprep.subr.mxu0 0.0
        %337 = vmatpush1.msra.mxu0 %v278
        %338 = vmatprep.subr.mxu0 0.0
        %339 = vmatpush1.msra.mxu0 %v279
        %340 = vmatprep.subr.mxu0 0.0
        %341 = vmatpush1.msra.mxu0 %v280
        %342 = vmatprep.subr.mxu0 0.0
        %343 = vmatpush1.msra.mxu0 %v281
        %344 = vmatprep.subr.mxu0 0.0
        %345 = vmatpush1.msra.mxu0 %v282
        %346 = vmatprep.subr.mxu0 0.0
        %347 = vmatpush1.msra.mxu0 %v283
        %348 = vmatprep.mubr.f32.mxu0 %v251
        %349 = vmatmul.mubr.f32.gmra.mrb[0].mxu0 %v250
        %v350 = vpop.f32.mrb[0].mxu0
        %v351 = vadd.f32 0.0, %v350
        %v352 = vpop.f32.mrb[0].mxu0
        %353 = vdwg.mxu0
        %v354 = vld [vmem:[%s2] sm:$0xff]
        %v355 = vld [vmem:[%s3] sm:$0xff]
        %357 = vset.pattern.permute.xlu0 0
        %358 = vperm.xlu0 %357, %v355
        %v359 = vpop.permute.xlu0 %358
        %vm361 = vcmask 64512
        %v363 = vsel %vm361, %v354, 0
        %365 = vmatprep.subr.mxu0 0.0
        %366 = vmatpush1.msra.mxu0 %v351
        %367 = vmatprep.subr.mxu0 0.0
        %368 = vmatpush1.msra.mxu0 0.0
        %369 = vmatprep.subr.mxu0 0.0
        %370 = vmatpush1.msra.mxu0 0.0
        %371 = vmatprep.subr.mxu0 0.0
        %372 = vmatpush1.msra.mxu0 0.0
        %373 = vmatprep.subr.mxu0 0.0
        %374 = vmatpush1.msra.mxu0 0.0
        %375 = vmatprep.subr.mxu0 0.0
        %376 = vmatpush1.msra.mxu0 0.0
        %377 = vmatprep.subr.mxu0 0.0
        %378 = vmatpush1.msra.mxu0 0.0
        %379 = vmatprep.subr.mxu0 0.0
        %380 = vmatpush1.msra.mxu0 0.0
        %381 = vmatprep.subr.mxu0 0.0
        %382 = vmatpush1.msra.mxu0 0.0
        %383 = vmatprep.subr.mxu0 0.0
        %384 = vmatpush1.msra.mxu0 0.0
        %385 = vmatprep.subr.mxu0 0.0
        %386 = vmatpush1.msra.mxu0 0.0
        %387 = vmatprep.subr.mxu0 0.0
        %388 = vmatpush1.msra.mxu0 0.0
        %389 = vmatprep.subr.mxu0 0.0
        %390 = vmatpush1.msra.mxu0 0.0
        %391 = vmatprep.subr.mxu0 0.0
        %392 = vmatpush1.msra.mxu0 0.0
        %393 = vmatprep.subr.mxu0 0.0
        %394 = vmatpush1.msra.mxu0 0.0
        %395 = vmatprep.subr.mxu0 0.0
        %396 = vmatpush1.msra.mxu0 0.0
        %397 = vmatprep.subr.mxu0 0.0
        %398 = vmatpush1.msra.mxu0 0.0
        %399 = vmatprep.subr.mxu0 0.0
        %400 = vmatpush1.msra.mxu0 0.0
        %401 = vmatprep.subr.mxu0 0.0
        %402 = vmatpush1.msra.mxu0 0.0
        %403 = vmatprep.subr.mxu0 0.0
        %404 = vmatpush1.msra.mxu0 0.0
        %405 = vmatprep.subr.mxu0 0.0
        %406 = vmatpush1.msra.mxu0 0.0
        %407 = vmatprep.subr.mxu0 0.0
        %408 = vmatpush1.msra.mxu0 0.0
        %409 = vmatprep.subr.mxu0 0.0
        %410 = vmatpush1.msra.mxu0 0.0
        %411 = vmatprep.subr.mxu0 0.0
        %412 = vmatpush1.msra.mxu0 0.0
        %413 = vmatprep.subr.mxu0 0.0
        %414 = vmatpush1.msra.mxu0 0.0
        %415 = vmatprep.subr.mxu0 0.0
        %416 = vmatpush1.msra.mxu0 0.0
        %417 = vmatprep.subr.mxu0 0.0
        %418 = vmatpush1.msra.mxu0 0.0
        %419 = vmatprep.subr.mxu0 0.0
        %420 = vmatpush1.msra.mxu0 0.0
        %421 = vmatprep.subr.mxu0 0.0
        %422 = vmatpush1.msra.mxu0 0.0
        %423 = vmatprep.subr.mxu0 0.0
        %424 = vmatpush1.msra.mxu0 0.0
        %425 = vmatprep.subr.mxu0 0.0
        %426 = vmatpush1.msra.mxu0 0.0
        %427 = vmatprep.subr.mxu0 0.0
        %428 = vmatpush1.msra.mxu0 0.0
        %429 = vmatprep.mubr.f32.mxu0 0.0
        %430 = vmatmul.mubr.f32.gmra.mrb[0].mxu0 %v363
        %v431 = vpop.f32.mrb[0].mxu0
        %v432 = vadd.f32 %v359, %v431
        %v433 = vpop.f32.mrb[0].mxu0
        %434 = vdwg.mxu0
        %v435 = vmax.f32 %v432, 0.0
        %v436 = vld [vmem:[%s4] sm:$0xff]
        %v437 = vmul.f32 %v435, %v436
        %v438 = vld [vmem:[%s5] sm:$0xff]
        %v439 = vld [vmem:[%s5 + $0x8] sm:$0xff]
        %v440 = vld [vmem:[%s5 + $0x10] sm:$0xff]
        %v441 = vld [vmem:[%s5 + $0x18] sm:$0xff]
        %v442 = vld [vmem:[%s5 + $0x20] sm:$0xff]
        %v443 = vld [vmem:[%s5 + $0x28] sm:$0xff]
        %v444 = vld [vmem:[%s5 + $0x30] sm:$0xff]
        %v445 = vld [vmem:[%s5 + $0x38] sm:$0xff]
        %v446 = vld [vmem:[%s5 + $0x40] sm:$0xff]
        %v447 = vld [vmem:[%s5 + $0x48] sm:$0xff]
        %v448 = vld [vmem:[%s5 + $0x50] sm:$0xff]
        %v449 = vld [vmem:[%s5 + $0x58] sm:$0xff]
        %v450 = vld [vmem:[%s5 + $0x60] sm:$0xff]
        %v451 = vld [vmem:[%s5 + $0x68] sm:$0xff]
        %v452 = vld [vmem:[%s5 + $0x70] sm:$0xff]
        %v453 = vld [vmem:[%s5 + $0x78] sm:$0xff]
        %v454 = vld [vmem:[%s5 + $0x80] sm:$0xff]
        %v455 = vld [vmem:[%s5 + $0x88] sm:$0xff]
        %v456 = vld [vmem:[%s5 + $0x90] sm:$0xff]
        %v457 = vld [vmem:[%s5 + $0x98] sm:$0xff]
        %v458 = vld [vmem:[%s5 + $0xa0] sm:$0x1f]
        %v459 = vld [vmem:[%s5 + $0xa8] sm:$0x1f]
        %vm460 = vcmask 695296
        %v462 = vsel %vm460, %v437, 0
        %vm464 = vcmask 1044480
        %v466 = vsel %vm464, %v458, 0
        %v469 = vsel %vm464, %v459, 0
        %471 = vmatprep.subr.mxu0 %v439
        %472 = vmatpush1.msra.mxu0 %v438
        %473 = vmatprep.subr.mxu0 %v441
        %474 = vmatpush1.msra.mxu0 %v440
        %475 = vmatprep.subr.mxu0 %v443
        %476 = vmatpush1.msra.mxu0 %v442
        %477 = vmatprep.subr.mxu0 %v445
        %478 = vmatpush1.msra.mxu0 %v444
        %479 = vmatprep.subr.mxu0 %v447
        %480 = vmatpush1.msra.mxu0 %v446
        %481 = vmatprep.subr.mxu0 %v449
        %482 = vmatpush1.msra.mxu0 %v448
        %483 = vmatprep.subr.mxu0 %v451
        %484 = vmatpush1.msra.mxu0 %v450
        %485 = vmatprep.subr.mxu0 %v453
        %486 = vmatpush1.msra.mxu0 %v452
        %487 = vmatprep.subr.mxu0 %v455
        %488 = vmatpush1.msra.mxu0 %v454
        %489 = vmatprep.subr.mxu0 %v457
        %490 = vmatpush1.msra.mxu0 %v456
        %491 = vmatprep.subr.mxu0 %v469
        %492 = vmatpush1.msra.mxu0 %v466
        %493 = vmatprep.subr.mxu0 0.0
        %494 = vmatpush1.msra.mxu0 0.0
        %495 = vmatprep.subr.mxu0 0.0
        %496 = vmatpush1.msra.mxu0 0.0
        %497 = vmatprep.subr.mxu0 0.0
        %498 = vmatpush1.msra.mxu0 0.0
        %499 = vmatprep.subr.mxu0 0.0
        %500 = vmatpush1.msra.mxu0 0.0
        %501 = vmatprep.subr.mxu0 0.0
        %502 = vmatpush1.msra.mxu0 0.0
        %503 = vmatprep.subr.mxu0 0.0
        %504 = vmatpush1.msra.mxu0 0.0
        %505 = vmatprep.subr.mxu0 0.0
        %506 = vmatpush1.msra.mxu0 0.0
        %507 = vmatprep.subr.mxu0 0.0
        %508 = vmatpush1.msra.mxu0 0.0
        %509 = vmatprep.subr.mxu0 0.0
        %510 = vmatpush1.msra.mxu0 0.0
        %511 = vmatprep.subr.mxu0 0.0
        %512 = vmatpush1.msra.mxu0 0.0
        %513 = vmatprep.subr.mxu0 0.0
        %514 = vmatpush1.msra.mxu0 0.0
        %515 = vmatprep.subr.mxu0 0.0
        %516 = vmatpush1.msra.mxu0 0.0
        %517 = vmatprep.subr.mxu0 0.0
        %518 = vmatpush1.msra.mxu0 0.0
        %519 = vmatprep.subr.mxu0 0.0
        %520 = vmatpush1.msra.mxu0 0.0
        %521 = vmatprep.subr.mxu0 0.0
        %522 = vmatpush1.msra.mxu0 0.0
        %523 = vmatprep.subr.mxu0 0.0
        %524 = vmatpush1.msra.mxu0 0.0
        %525 = vmatprep.subr.mxu0 0.0
        %526 = vmatpush1.msra.mxu0 0.0
        %527 = vmatprep.subr.mxu0 0.0
        %528 = vmatpush1.msra.mxu0 0.0
        %529 = vmatprep.subr.mxu0 0.0
        %530 = vmatpush1.msra.mxu0 0.0
        %531 = vmatprep.subr.mxu0 0.0
        %532 = vmatpush1.msra.mxu0 0.0
        %533 = vmatprep.subr.mxu0 0.0
        %534 = vmatpush1.msra.mxu0 0.0
        %535 = vmatprep.mubr.f32.mxu0 0.0
        %536 = vmatmul.mubr.f32.gmra.mrb[0].mxu0 %v462
        %v537 = vpop.f32.mrb[0].mxu0
        %v538 = vadd.f32 0.0, %v537
        %v539 = vpop.f32.mrb[0].mxu0
        %v540 = vadd.f32 0.0, %v539
        %541 = vdwg.mxu0
        %542 = vst [vmem:[%s244] sm:$0xff] %v250
        %543 = vst [vmem:[%s244 + $0x8] sm:$0xff] %v251
        %544 = vst [vmem:[%s244 + $0x10] sm:$0xff] %v538
        %545 = vst [vmem:[%s244 + $0x18] sm:$0xff] %v540
        %s546 = sand.u32 %s159, 1
        %s547 = scalar_lea.sflag [#allocation3], %s546
        %s548 = sand.u32 %s159, 1
        %s549 = smul.addr %s548, 32
        %s550 = scalar_lea.vmem [#allocation2], %s549
        // Predicated region
        $region45: #{tpu_custom_call.1} parent=43 // pred_check
          %p551 = pneg %p169
        $region46: #{tpu_custom_call.1} parent=43 // pred_check_branch
          %553 = sbr.rel (%p551) target = $region48
        $region47: #{tpu_custom_call.1} parent=43 // pred_region
          %s555 = ssub.s32 512, 512
          %556 = vsyncadd %s547, %s555
          %s557 = smul.addr %s20, 4
          %s558 = smul.addr %s557, 128
          %s559 = scalar_lea.hbm %s6, %s558
          %s560 = sshll.u32 %s550, 4
          %s561 = int_to_ptr.vmem [resolvable:$true] %s560
          %566 = dma.vmem_to_hbm [thread:$0]  %s561, 512, %s559, %s547, 256, 256, 16
        $region48: #{tpu_custom_call.1} parent=43 // pred_fallthru
          _
      $region44: #{tpu_custom_call.1} parent=5 // pred_fallthru
        _
      %p567 = scmp.le.s32.totalorder 2, %s15
      // Predicated region
      $region49: #{tpu_custom_call.1} parent=5 // pred_check
        %p568 = pneg %p567
      $region50: #{tpu_custom_call.1} parent=5 // pred_check_branch
        %570 = sbr.rel (%p568) target = $region52
      $region51: #{tpu_custom_call.1} parent=5 // pred_region
        %s571 = ssub.s32 %s15, 2
        // Predicated region
        $region53: #{tpu_custom_call.1} parent=51 // pred_check
          %p572 = pneg %p175
        $region54: #{tpu_custom_call.1} parent=51 // pred_check_branch
          %574 = sbr.rel (%p572) target = $region56
        $region55: #{tpu_custom_call.1} parent=51 // pred_region
          %s575 = sand.u32 %s160, 1
          %s576 = scalar_lea.sflag [#allocation3], %s575
          %s577 = sand.u32 %s160, 1
          %s578 = smul.addr %s577, 32
          %s579 = scalar_lea.vmem [#allocation2], %s578
          %580 = dma.done %s576, 512
        $region56: #{tpu_custom_call.1} parent=51 // pred_fallthru
          _
      $region52: #{tpu_custom_call.1} parent=5 // pred_fallthru
        _
    $region6: #{tpu_custom_call.1} parent=1 // loop_footer
      %s19 = sadd.s32 1, %s15
    $region7: #{tpu_custom_call.1} parent=1 // loop_footer_branch
      %14 = sbr.rel target = $region3
    $region8: #{tpu_custom_call.1} parent=1 // loop_exit
      _
    %581 = vsyncpa [#allocation3], 1
    %s582 = scalar_lea.sflag [#allocation3], 1
    %583 = vsyncpa %s582, 1

</llo_original>
